<compile_context>
chip_gen: v5e
topology: v5e:2x2
jax: 0.10.0
libtpu: 0.0.40
codegen_flags: <defaults>
</compile_context>

<pallas_src>
import jax
import jax.numpy as jnp
from jax.experimental import pallas as pl
from jax.experimental.pallas import tpu as pltpu

_LANES = 128
_SUBLANES = 8


def _round_up(n, m):
    return ((n + m - 1) // m) * m


def rbf_kernel(x_ref, w_ref, wsq_ref, o_ref):
    # x_ref:   (tb, IN_pad)          zero-padded inputs
    # w_ref:   (IN_pad, OUT_pad)     cached  -2 * weight  (zero-padded)
    # wsq_ref: (1, OUT_pad)          cached  ||w_col||^2  (zeros in pad cols)
    # o_ref:   (tb, OUT_pad)
    x = x_ref[...]
    # Cross term on the MXU; -2 already folded into w at init. f32 accumulation.
    xw = jnp.dot(x, w_ref[...], preferred_element_type=jnp.float32)
    xf = x.astype(jnp.float32)
    x_sq = jnp.sum(xf * xf, axis=-1, keepdims=True)                 # (tb, 1)
    out = xw + x_sq + wsq_ref[...]                                  # (tb, OUT_pad)
    # Guard against catastrophic cancellation (true result is >= 0).
    o_ref[...] = jnp.maximum(out, 0.0).astype(o_ref.dtype)


class RBFLayerPallas:
    """Pallas TPU equivalent of the PyTorch RBFLayer (weights preprocessed once)."""

    def __init__(self, weight, *, compute_dtype=jnp.float32,
                 vmem_budget_bytes=16 << 20):
        w = jnp.asarray(weight, dtype=jnp.float32)
        self.in_features, self.out_features = w.shape
        self.compute_dtype = jnp.dtype(compute_dtype)   # bf16 OK for big reuse
        self.vmem_budget_bytes = int(vmem_budget_bytes)

        self.in_pad = _round_up(self.in_features, _LANES)
        self.out_pad = _round_up(self.out_features, _LANES)

        # ||w_col||^2 in f32, zero in padded columns.
        wsq = jnp.sum(w * w, axis=0, keepdims=True)                  # (1, OUT)
        self.wsq = jnp.pad(wsq, ((0, 0), (0, self.out_pad - self.out_features)))

        # Fold -2 into the weight and zero-pad both dims (one-time cost).
        w_scaled = jnp.pad(-2.0 * w,
                           ((0, self.in_pad - self.in_features),
                            (0, self.out_pad - self.out_features)))
        self.w_scaled = w_scaled.astype(self.compute_dtype)

        # Single-dispatch hot path.
        self._fwd = jax.jit(self._forward, static_argnames=("return_padded",))

    # -- tile selection -----------------------------------------------------
    def _vmem_estimate(self, tb):
        isz = self.compute_dtype.itemsize
        resident = self.in_pad * self.out_pad * isz + self.out_pad * 4
        streaming = 2 * tb * (self.in_pad * isz + self.out_pad * 4)  # dbl-buffered
        return resident + streaming

    def _pick_tb(self, B):
        isz = self.compute_dtype.itemsize
        resident = self.in_pad * self.out_pad * isz + self.out_pad * 4
        per_row = 2 * (self.in_pad * isz + self.out_pad * 4)
        cap = max(_SUBLANES, (self.vmem_budget_bytes - resident) // per_row)

        # Tiny batch: one grid step — per-step overhead would exceed the matmul.
        if B <= min(cap, 256):
            return B
        # Large batch: >= 2 grid steps (megacore on v7x, DMA/compute overlap).
        target = min(cap, B // 2)
        best = None
        d = 1
        while d * d <= B:
            if B % d == 0:
                for cand in (d, B // d):
                    if cand <= target and cand % _SUBLANES == 0:
                        if best is None or cand > best:
                            best = cand
            d += 1
        return best if best is not None else B

    # -- forward ------------------------------------------------------------
    def _forward(self, x, *, return_padded=False):
        B, IN = x.shape
        assert IN == self.in_features, "feature dims must match"
        if x.dtype != self.compute_dtype:
            x = x.astype(self.compute_dtype)
        if self.in_pad != IN:
            x = jnp.pad(x, ((0, 0), (0, self.in_pad - IN)))

        tb = self._pick_tb(B)
        assert B % tb == 0
        in_pad, out_pad = self.in_pad, self.out_pad
        vmem_limit = int(min(max(2 * self._vmem_estimate(tb), 16 << 20), 48 << 20))

        out = pl.pallas_call(
            rbf_kernel,
            out_shape=jax.ShapeDtypeStruct((B, out_pad), jnp.float32),
            grid_spec=pltpu.PrefetchScalarGridSpec(
                num_scalar_prefetch=0,
                grid=(B // tb,),
                in_specs=[
                    pl.BlockSpec((tb, in_pad), lambda b: (b, 0)),       # streamed x
                    pl.BlockSpec((in_pad, out_pad), lambda b: (0, 0)),  # resident -2*w
                    pl.BlockSpec((1, out_pad), lambda b: (0, 0)),       # resident ||w||^2
                ],
                out_specs=pl.BlockSpec((tb, out_pad), lambda b: (b, 0)),
            ),
            compiler_params=pltpu.CompilerParams(
                dimension_semantics=("parallel",),
                vmem_limit_bytes=vmem_limit,
            ),
        )(x, self.w_scaled, self.wsq)

        if return_padded:
            # NOTE: padded columns [OUT:OUT_pad] hold ||x||^2, not zeros —
            # consumers must mask them.
            return out
        return out[:, :self.out_features]

    def __call__(self, x, *, return_padded=False):
        return self._fwd(x, return_padded=return_padded)


if __name__ == "__main__":
    # LeNet-5 RBF output layer sizes: in_features=84, out_features=10
    B, IN, OUT = 16, 84, 10

    key = jax.random.PRNGKey(0)
    kx, kw = jax.random.split(key)
    x = jax.random.normal(kx, (B, IN), dtype=jnp.float32)
    # torch.rand(in_features, out_features) -> uniform [0, 1)
    weight = jax.random.uniform(kw, (IN, OUT), dtype=jnp.float32)

    layer = RBFLayerPallas(weight)
    out = jax.block_until_ready(layer(x))

    # pure-JAX reference of the exact PyTorch forward
    ref = jnp.sum((x[:, :, None] - weight[None, :, :]) ** 2, axis=1)
    assert out.shape == (B, OUT)
    assert jnp.allclose(out, ref, atol=1e-3, rtol=1e-4)

    print("KERNEL_OK")
</pallas_src>

<mosaic_0001>
module attributes {stable_mosaic.version = 11 : i64} {
  func.func @rbf_kernel(%arg0: i32, %arg1: memref<16x128xf32, #tpu.memory_space<vmem>>, %arg2: memref<128x128xf32, #tpu.memory_space<vmem>>, %arg3: memref<1x128xf32, #tpu.memory_space<vmem>>, %arg4: memref<16x128xf32, #tpu.memory_space<vmem>>) attributes {dimension_semantics = [#tpu.dimension_semantics<parallel>], iteration_bounds = array<i64: 1>, scalar_prefetch = 0 : i64, scratch_operands = 0 : i64, tpu.core_type = #tpu.core_type<tc>, window_params = [{transform_indices = @transform_0, window_bounds = array<i64: 16, 128>}, {pipeline_mode = #tpu.pipeline_mode<synchronous>, transform_indices = @transform_1, window_bounds = array<i64: 128, 128>}, {pipeline_mode = #tpu.pipeline_mode<synchronous>, transform_indices = @transform_2, window_bounds = array<i64: 1, 128>}, {transform_indices = @transform_3, window_bounds = array<i64: 16, 128>}]} {
    %c0 = arith.constant 0 : index
    %c0_0 = arith.constant 0 : index
    %0 = vector.load %arg1[%c0, %c0_0] : memref<16x128xf32, #tpu.memory_space<vmem>>, vector<16x128xf32>
    %c0_1 = arith.constant 0 : index
    %c0_2 = arith.constant 0 : index
    %1 = vector.load %arg2[%c0_1, %c0_2] : memref<128x128xf32, #tpu.memory_space<vmem>>, vector<128x128xf32>
    %cst = arith.constant dense<0.000000e+00> : vector<16x128xf32>
    %2 = tpu.matmul %0, %1, %cst {dimension_numbers = #tpu.dot_dimension_numbers<[1], [0], [0], [1], [0, 0, 1, 1], [], []>} : vector<16x128xf32>, vector<128x128xf32>, vector<16x128xf32> -> vector<16x128xf32>
    %3 = arith.mulf %0, %0 : vector<16x128xf32>
    %cst_3 = arith.constant dense<0.000000e+00> : vector<16xf32>
    %4 = vector.multi_reduction <add>, %3, %cst_3 [1] : vector<16x128xf32> to vector<16xf32>
    %5 = vector.shape_cast %4 : vector<16xf32> to vector<16x1xf32>
    %6 = vector.broadcast %5 : vector<16x1xf32> to vector<16x128xf32>
    %7 = arith.addf %2, %6 : vector<16x128xf32>
    %c0_4 = arith.constant 0 : index
    %c0_5 = arith.constant 0 : index
    %8 = vector.load %arg3[%c0_4, %c0_5] : memref<1x128xf32, #tpu.memory_space<vmem>>, vector<1x128xf32>
    %9 = vector.broadcast %8 : vector<1x128xf32> to vector<16x128xf32>
    %10 = arith.addf %7, %9 : vector<16x128xf32>
    %cst_6 = arith.constant 0.000000e+00 : f32
    %11 = vector.broadcast %cst_6 : f32 to vector<16x128xf32>
    %12 = arith.maximumf %10, %11 : vector<16x128xf32>
    %c0_7 = arith.constant 0 : index
    %c0_8 = arith.constant 0 : index
    %13 = vector.load %arg4[%c0_7, %c0_8] : memref<16x128xf32, #tpu.memory_space<vmem>>, vector<16x128xf32>
    tpu.vector_store %arg4[%c0_7, %c0_8], %12 {strides = array<i32>} : memref<16x128xf32, #tpu.memory_space<vmem>>, vector<16x128xf32>,
    return
  }
  func.func @transform_0(%arg0: i32) -> (i32, i32) {
    %c0_i32 = arith.constant 0 : i32
    %c0_i32_0 = arith.constant 0 : i32
    return %arg0, %c0_i32 : i32, i32
  }
  func.func @transform_1(%arg0: i32) -> (i32, i32) {
    %c0_i32 = arith.constant 0 : i32
    %c0_i32_0 = arith.constant 0 : i32
    %c0_i32_1 = arith.constant 0 : i32
    return %c0_i32, %c0_i32_0 : i32, i32
  }
  func.func @transform_2(%arg0: i32) -> (i32, i32) {
    %c0_i32 = arith.constant 0 : i32
    %c0_i32_0 = arith.constant 0 : i32
    %c0_i32_1 = arith.constant 0 : i32
    return %c0_i32, %c0_i32_0 : i32, i32
  }
  func.func @transform_3(%arg0: i32) -> (i32, i32) {
    %c0_i32 = arith.constant 0 : i32
    %c0_i32_0 = arith.constant 0 : i32
    return %arg0, %c0_i32 : i32, i32
  }
}

</mosaic_0001>

<llo_original>
// kernel: _forward.1
$region0: #{_forward.1}
  #allocation0 [shape = 'u32[]', space=smem, size = 0x4, offset = 0x4, fixed_abs, tag = 'smem constant byte address 0x4 - core index']
  #allocation1 [shape = 'u32[72,128]{1,0:T(1,128)}', space=vmem, size = 0x9000, scoped, tag = 'internal scratch']
  %s0 = inlined_call_operand.vmem [shape: f32[16,128], index: 0, kind: input, shape index: {}]
  %s1 = inlined_call_operand.hbm [shape: f32[128,128], index: 1, kind: input, shape index: {}]
  %s2 = inlined_call_operand.vmem [shape: f32[1,128], index: 2, kind: input, shape index: {}]
  %s3 = inlined_call_operand.hbm [shape: f32[16,128], index: 3, kind: output, shape index: {}]
  %s4 = sld [smem:[#allocation0]]
  $region26: #{_forward.1} parent=0
    _
  %s6 = ssub.s32 1, %s4
  %s7 = scalar_select 0, %s6, %s4
  $region1: #{_forward.1} parent=0
    #allocation2 [shape = 'u8[65536]{0}', space=vmem, size = 0x10000, scoped, tag = 'input window, operand 1, single buffered']
    #allocation3 [shape = 's32[1]{0}', space=sflag, size = 0x4, scoped, tag = 'scoped memory for _forward.1']
    #allocation4 [shape = 's32[1]{0}', space=sflag, size = 0x4, scoped, tag = 'scoped memory for _forward.1']
    #allocation5 [shape = 'u8[8192]{0}', space=vmem, size = 0x2000, scoped, tag = 'output window, operand 0, single buffered']
    %8 = vsyncpa [#allocation3], 0
    %9 = vsyncpa [#allocation4], 0
    // Predicated region
    $region2: #{_forward.1} parent=1 // pred_check
      _
    $region3: #{_forward.1} parent=1 // pred_check_branch
      %11 = sbr.rel (0) target = $region5
    $region4: #{_forward.1} parent=1 // pred_region
      _
    $region5: #{_forward.1} parent=1 // pred_fallthru
      _
    // Predicated region
    $region6: #{_forward.1} parent=1 // pred_check
      _
    $region7: #{_forward.1} parent=1 // pred_check_branch
      %13 = sbr.rel (0) target = $region9
    $region8: #{_forward.1} parent=1 // pred_region
      %15 = vsyncadd [#allocation3], 0
      %s16 = sshll.u32 %s1, 4
      %s17 = int_to_ptr.hbm [resolvable:$true] %s16
      %s18 = sshll.u32 [#allocation2], 4
      %s19 = int_to_ptr.vmem [resolvable:$true] %s18
      %24 = dma.hbm_to_vmem [thread:$0]  %s17, 2048, %s19, [#allocation3], 128, 128, 8
    $region9: #{_forward.1} parent=1 // pred_fallthru
      _
    // Predicated region
    $region10: #{_forward.1} parent=1 // pred_check
      _
    $region11: #{_forward.1} parent=1 // pred_check_branch
      %26 = sbr.rel (0) target = $region13
    $region12: #{_forward.1} parent=1 // pred_region
      _
    $region13: #{_forward.1} parent=1 // pred_fallthru
      _
    // Predicated region
    $region14: #{_forward.1} parent=1 // pred_check
      _
    $region15: #{_forward.1} parent=1 // pred_check_branch
      %28 = sbr.rel (0) target = $region17
    $region16: #{_forward.1} parent=1 // pred_region
      %30 = dma.done [#allocation3], 2048
    $region17: #{_forward.1} parent=1 // pred_fallthru
      _
    %v31 = vld [vmem:[%s0] sm:$0xff]
    %v32 = vld [vmem:[%s0 + $0x8] sm:$0xff]
    %v33 = vld [vmem:[#allocation2] sm:$0xff]
    %v34 = vld [vmem:[#allocation2 + $0x8] sm:$0xff]
    %v35 = vld [vmem:[#allocation2 + $0x10] sm:$0xff]
    %v36 = vld [vmem:[#allocation2 + $0x18] sm:$0xff]
    %v37 = vld [vmem:[#allocation2 + $0x20] sm:$0xff]
    %v38 = vld [vmem:[#allocation2 + $0x28] sm:$0xff]
    %v39 = vld [vmem:[#allocation2 + $0x30] sm:$0xff]
    %v40 = vld [vmem:[#allocation2 + $0x38] sm:$0xff]
    %v41 = vld [vmem:[#allocation2 + $0x40] sm:$0xff]
    %v42 = vld [vmem:[#allocation2 + $0x48] sm:$0xff]
    %v43 = vld [vmem:[#allocation2 + $0x50] sm:$0xff]
    %v44 = vld [vmem:[#allocation2 + $0x58] sm:$0xff]
    %v45 = vld [vmem:[#allocation2 + $0x60] sm:$0xff]
    %v46 = vld [vmem:[#allocation2 + $0x68] sm:$0xff]
    %v47 = vld [vmem:[#allocation2 + $0x70] sm:$0xff]
    %v48 = vld [vmem:[#allocation2 + $0x78] sm:$0xff]
    %v49 = vmul.f32 %v31, %v31
    %v50 = vmul.f32 %v32, %v32
    %51 = vadd.xlane.f32.xlu0 %v49
    %v52 = vpop.xlane.xlu0 %51
    %53 = vadd.xlane.f32.xlu0 %v50
    %v54 = vpop.xlane.xlu0 %53
    %55 = vmatpush.msra.mxu0 %v48
    %56 = vmatpush.msra.mxu0 %v47
    %57 = vmatpush.msra.mxu0 %v46
    %58 = vmatpush.msra.mxu0 %v45
    %59 = vmatpush.msra.mxu0 %v44
    %60 = vmatpush.msra.mxu0 %v43
    %61 = vmatpush.msra.mxu0 %v42
    %62 = vmatpush.msra.mxu0 %v41
    %63 = vmatpush.msra.mxu0 %v40
    %64 = vmatpush.msra.mxu0 %v39
    %65 = vmatpush.msra.mxu0 %v38
    %66 = vmatpush.msra.mxu0 %v37
    %67 = vmatpush.msra.mxu0 %v36
    %68 = vmatpush.msra.mxu0 %v35
    %69 = vmatpush.msra.mxu0 %v34
    %70 = vmatpush.msra.mxu0 %v33
    %71 = vmatmul.f32.gmra.mxu0 %v31
    %v72 = vpop.f32.mrf.mxu0
    %v73 = vadd.f32 %v52, %v72
    %74 = vmatmul.f32.gmra.mxu0 %v32
    %v75 = vpop.f32.mrf.mxu0
    %v76 = vadd.f32 %v54, %v75
    %77 = vdwg.mxu0
    %v78 = vld [vmem:[%s2] sm:$0x1]
    %v80 = vperm.slane %v78, 0
    %v82 = vadd.f32 %v73, %v80
    %v83 = vadd.f32 %v76, %v80
    %v84 = vmax.f32 %v82, 0.0
    %v85 = vmax.f32 %v83, 0.0
    %86 = vst [vmem:[#allocation5] sm:$0xff] %v84
    %87 = vst [vmem:[#allocation5 + $0x8] sm:$0xff] %v85
    // Predicated region
    $region18: #{_forward.1} parent=1 // pred_check
      _
    $region19: #{_forward.1} parent=1 // pred_check_branch
      %89 = sbr.rel (0) target = $region21
    $region20: #{_forward.1} parent=1 // pred_region
      %91 = vsyncadd [#allocation4], 0
      %s92 = sshll.u32 [#allocation5], 4
      %s93 = int_to_ptr.vmem [resolvable:$true] %s92
      %s94 = sshll.u32 %s3, 4
      %s95 = int_to_ptr.hbm [resolvable:$true] %s94
      %100 = dma.vmem_to_hbm [thread:$0]  %s93, 256, %s95, [#allocation4], 128, 128, 8
    $region21: #{_forward.1} parent=1 // pred_fallthru
      _
    // Predicated region
    $region22: #{_forward.1} parent=1 // pred_check
      _
    $region23: #{_forward.1} parent=1 // pred_check_branch
      %102 = sbr.rel (0) target = $region25
    $region24: #{_forward.1} parent=1 // pred_region
      %104 = dma.done [#allocation4], 256
    $region25: #{_forward.1} parent=1 // pred_fallthru
      _
    %105 = vsyncpa [#allocation3], 1
    %106 = vsyncpa [#allocation4], 1

</llo_original>
